<compile_context>
chip_gen: v5e
topology: v5e:2x2
jax: 0.10.0
libtpu: 0.0.40
codegen_flags: <defaults>
</compile_context>

<pallas_src>
import jax
import jax.numpy as jnp
from jax.experimental import pallas as pl
from jax.experimental.pallas import tpu as pltpu


def _log_kernel(x_ref, o_ref):
    # Elementwise natural log on the VMEM tile (EUP/VPU path).
    o_ref[...] = jnp.log(x_ref[...])


def _choose_lane_width(total: int) -> int:
    """Largest lane width (multiple of 128) that evenly divides `total`."""
    for cand in (4096, 2048, 1024, 512, 256, 128):
        if total % cand == 0:
            return cand
    return 0  # no clean lane-dense reshape; caller pads


def log_layer(x: jax.Array, *, target_block_bytes: int = 1 << 20) -> jax.Array:
    """Pallas equivalent of LogLayer.forward: elementwise natural log."""
    orig_shape = x.shape
    orig_dtype = x.dtype
    total = x.size
    if total == 0:
        return x  # empty tensor: nothing to compute

    itemsize = jnp.dtype(orig_dtype).itemsize
    # Sublane packing factor: 8 rows/vreg at 32-bit, 16 at bf16, 32 at 8-bit.
    pack = 8 * max(1, 4 // itemsize)

    flat = x.reshape(-1)
    lane = _choose_lane_width(total)
    padded_total = total
    if lane == 0:
        # Fallback: pad flat array to a multiple of 128 with 1.0 (log(1) == 0);
        # the padded tail is sliced off after the kernel.
        lane = 128
        padded_total = pl.cdiv(total, lane) * lane
        flat = jnp.pad(flat, (0, padded_total - total), constant_values=1)

    rows = padded_total // lane

    # Row tile: ~target_block_bytes per input block, aligned to sublane packing.
    tile_r = max(pack, (target_block_bytes // (lane * itemsize)) // pack * pack)
    if tile_r >= rows:
        tile_r = rows  # full-extent sublane block (always legal)

    grid = (pl.cdiv(rows, tile_r),)

    x2d = flat.reshape(rows, lane)
    out2d = pl.pallas_call(
        _log_kernel,
        out_shape=jax.ShapeDtypeStruct((rows, lane), orig_dtype),
        grid_spec=pltpu.PrefetchScalarGridSpec(
            num_scalar_prefetch=0,
            grid=grid,
            in_specs=[pl.BlockSpec((tile_r, lane), lambda i: (i, 0))],
            out_specs=pl.BlockSpec((tile_r, lane), lambda i: (i, 0)),
        ),
        compiler_params=pltpu.CompilerParams(
            dimension_semantics=("parallel",)
        ),
    )(x2d)

    out_flat = out2d.reshape(-1)
    if padded_total != total:
        out_flat = out_flat[:total]
    return out_flat.reshape(orig_shape)


if __name__ == "__main__":
    key = jax.random.PRNGKey(0)

    # Primary check: small NCHW input consistent with the module's forward.
    # Strictly positive values so log is well-defined (matches torch.log on
    # positive inputs).
    x = jax.random.uniform(
        key, (2, 4, 16, 16), dtype=jnp.float32, minval=0.1, maxval=4.0
    )
    y = log_layer(x)
    jax.block_until_ready(y)
    ref = jnp.log(x)
    assert y.shape == x.shape and y.dtype == x.dtype
    assert jnp.allclose(y, ref, atol=1e-6, rtol=1e-6)

    # Secondary check: odd total (not a multiple of 128) exercises the
    # pad-and-slice fallback path.
    x2 = jax.random.uniform(
        jax.random.PRNGKey(1), (2, 3, 7, 5), dtype=jnp.float32,
        minval=0.1, maxval=4.0
    )
    y2 = log_layer(x2)
    jax.block_until_ready(y2)
    assert y2.shape == x2.shape and y2.dtype == x2.dtype
    assert jnp.allclose(y2, jnp.log(x2), atol=1e-6, rtol=1e-6)

    print("KERNEL_OK")
</pallas_src>

<mosaic_0001>
module attributes {stable_mosaic.version = 11 : i64} {
  func.func @_log_kernel(%arg0: i32, %arg1: memref<1x2048xf32, #tpu.memory_space<vmem>>, %arg2: memref<1x2048xf32, #tpu.memory_space<vmem>>) attributes {dimension_semantics = [#tpu.dimension_semantics<parallel>], iteration_bounds = array<i64: 1>, scalar_prefetch = 0 : i64, scratch_operands = 0 : i64, tpu.core_type = #tpu.core_type<tc>, window_params = [{transform_indices = @transform_0, window_bounds = array<i64: 1, 2048>}, {transform_indices = @transform_1, window_bounds = array<i64: 1, 2048>}]} {
    %c0 = arith.constant 0 : index
    %c0_0 = arith.constant 0 : index
    %0 = vector.load %arg1[%c0, %c0_0] : memref<1x2048xf32, #tpu.memory_space<vmem>>, vector<1x2048xf32>
    %1 = math.log %0 : vector<1x2048xf32>
    %c0_1 = arith.constant 0 : index
    %c0_2 = arith.constant 0 : index
    %2 = vector.load %arg2[%c0_1, %c0_2] : memref<1x2048xf32, #tpu.memory_space<vmem>>, vector<1x2048xf32>
    tpu.vector_store %arg2[%c0_1, %c0_2], %1 {strides = array<i32>} : memref<1x2048xf32, #tpu.memory_space<vmem>>, vector<1x2048xf32>,
    return
  }
  func.func @transform_0(%arg0: i32) -> (i32, i32) {
    %c0_i32 = arith.constant 0 : i32
    %c0_i32_0 = arith.constant 0 : i32
    return %arg0, %c0_i32 : i32, i32
  }
  func.func @transform_1(%arg0: i32) -> (i32, i32) {
    %c0_i32 = arith.constant 0 : i32
    %c0_i32_0 = arith.constant 0 : i32
    return %arg0, %c0_i32 : i32, i32
  }
}

</mosaic_0001>

<llo_original>
// kernel: tpu_custom_call.1
$region0: #{tpu_custom_call.1}
  #allocation0 [shape = 'u32[]', space=smem, size = 0x4, offset = 0x4, fixed_abs, tag = 'smem constant byte address 0x4 - core index']
  #allocation1 [shape = 'u32[72,128]{1,0:T(1,128)}', space=vmem, size = 0x9000, scoped, tag = 'internal scratch']
  %s0 = inlined_call_operand.hbm [shape: f32[1,2048], index: 0, kind: input, shape index: {}]
  %s1 = inlined_call_operand.hbm [shape: f32[1,2048], index: 1, kind: output, shape index: {}]
  %s2 = sld [smem:[#allocation0]]
  $region18: #{tpu_custom_call.1} parent=0
    _
  %s4 = ssub.s32 1, %s2
  %s5 = scalar_select 0, %s4, %s2
  $region1: #{tpu_custom_call.1} parent=0
    #allocation2 [shape = 'u8[8192]{0}', space=vmem, size = 0x2000, scoped, tag = 'input window, operand 0, single buffered']
    #allocation3 [shape = 's32[1]{0}', space=sflag, size = 0x4, scoped, tag = 'scoped memory for tpu_custom_call.1']
    #allocation4 [shape = 's32[1]{0}', space=sflag, size = 0x4, scoped, tag = 'scoped memory for tpu_custom_call.1']
    #allocation5 [shape = 'u8[8192]{0}', space=vmem, size = 0x2000, scoped, tag = 'output window, operand 0, single buffered']
    %6 = vsyncpa [#allocation3], 0
    %7 = vsyncpa [#allocation4], 0
    // Predicated region
    $region2: #{tpu_custom_call.1} parent=1 // pred_check
      _
    $region3: #{tpu_custom_call.1} parent=1 // pred_check_branch
      %9 = sbr.rel (0) target = $region5
    $region4: #{tpu_custom_call.1} parent=1 // pred_region
      %11 = vsyncadd [#allocation3], 0
      %s13 = sshll.u32 %s0, 4
      %s14 = int_to_ptr.hbm [resolvable:$true] %s13
      %s15 = sshll.u32 [#allocation2], 4
      %s16 = int_to_ptr.vmem [resolvable:$true] %s15
      %18 = dma.hbm_to_vmem [thread:$0]  %s14, 256, %s16, [#allocation3]
    $region5: #{tpu_custom_call.1} parent=1 // pred_fallthru
      _
    // Predicated region
    $region6: #{tpu_custom_call.1} parent=1 // pred_check
      _
    $region7: #{tpu_custom_call.1} parent=1 // pred_check_branch
      %20 = sbr.rel (0) target = $region9
    $region8: #{tpu_custom_call.1} parent=1 // pred_region
      %22 = dma.done [#allocation3], 256
    $region9: #{tpu_custom_call.1} parent=1 // pred_fallthru
      _
    %v23 = vld [vmem:[#allocation2] sm:$0xff]
    %v24 = vld [vmem:[#allocation2 + $0x8] sm:$0xff]
    %v25 = vlog2.pop %v23
    %v26 = vmul.f32 %v25, 0.6931472
    %v27 = vlog2.pop %v24
    %v28 = vmul.f32 %v27, 0.6931472
    %29 = vst [vmem:[#allocation5] sm:$0xff] %v26
    %30 = vst [vmem:[#allocation5 + $0x8] sm:$0xff] %v28
    // Predicated region
    $region10: #{tpu_custom_call.1} parent=1 // pred_check
      _
    $region11: #{tpu_custom_call.1} parent=1 // pred_check_branch
      %32 = sbr.rel (0) target = $region13
    $region12: #{tpu_custom_call.1} parent=1 // pred_region
      %34 = vsyncadd [#allocation4], 0
      %s36 = sshll.u32 [#allocation5], 4
      %s37 = int_to_ptr.vmem [resolvable:$true] %s36
      %s38 = sshll.u32 %s1, 4
      %s39 = int_to_ptr.hbm [resolvable:$true] %s38
      %41 = dma.vmem_to_hbm [thread:$0]  %s37, 256, %s39, [#allocation4]
    $region13: #{tpu_custom_call.1} parent=1 // pred_fallthru
      _
    // Predicated region
    $region14: #{tpu_custom_call.1} parent=1 // pred_check
      _
    $region15: #{tpu_custom_call.1} parent=1 // pred_check_branch
      %43 = sbr.rel (0) target = $region17
    $region16: #{tpu_custom_call.1} parent=1 // pred_region
      %45 = dma.done [#allocation4], 256
    $region17: #{tpu_custom_call.1} parent=1 // pred_fallthru
      _
    %46 = vsyncpa [#allocation3], 1
    %47 = vsyncpa [#allocation4], 1

</llo_original>
